<compile_context>
chip_gen: v7x
topology: tpu7x:2x2x1
jax: 0.10.0
libtpu: 0.0.40
codegen_flags: <defaults>
</compile_context>

<pallas_src>
import functools

import jax
import jax.numpy as jnp
from jax.experimental import pallas as pl
from jax.experimental.pallas import tpu as pltpu


def mdn_kernel(x_ref, w1_ref, b1_ref, w2_ref, b2_ref, w3_ref, b3_ref, bd_ref,
               out_ref, *, P):
    """Fused 3-layer MLP + MDN head for one batch tile.

    Output layout (lane-aligned, P = round_up(O*G, 128)):
        cols [0,  P)  : pi     (softmax over each aligned G-sized group)
        cols [P, 2P)  : sigma  (exp + 0.01)
        cols [2P,3P)  : mu     (identity)
    Padding columns compute to harmless finite values and are sliced off in the
    wrapper.
    """
    cdt = w1_ref.dtype  # MXU operand dtype (bf16 by default)

    # ---------------- 3-layer MLP (bf16 operands, f32 accumulation) ---------
    x = x_ref[...].astype(cdt)      # in-kernel cast: hidden under the pipeline
    h1 = jnp.dot(x, w1_ref[...], preferred_element_type=jnp.float32) + b1_ref[...]
    h1 = jnp.maximum(h1, 0.0).astype(cdt)
    h2 = jnp.dot(h1, w2_ref[...], preferred_element_type=jnp.float32) + b2_ref[...]
    h2 = jnp.maximum(h2, 0.0).astype(cdt)
    out = jnp.dot(h2, w3_ref[...], preferred_element_type=jnp.float32) + b3_ref[...]

    # One lane-dense full-width store; the mu third (cols 2P:3P) is already final.
    out_ref[...] = out

    # ---------------- pi: grouped softmax over aligned G-blocks -------------
    pi_raw = out_ref[:, pl.ds(0, P)]          # read back so `out` can die
    # Row-wide max is constant within every group, so softmax(x - shift) is
    # exact; one XLU lane-reduce, independent of O and G.
    shift = jnp.max(pi_raw, axis=-1, keepdims=True)
    e = jnp.exp(pi_raw - shift)
    # Per-group sums, broadcast back to every member, in ONE MXU matmul with a
    # constant block-diagonal 0/1 grouping matrix (head cost independent of O).
    denom = jnp.dot(e, bd_ref[...], preferred_element_type=jnp.float32)
    denom = jnp.maximum(denom, 1e-30)         # guard padded / degenerate groups
    r = pl.reciprocal(denom, approx=True)     # EUP slot (nearly free)
    r = r * (2.0 - denom * r)                 # one Newton step -> f32-exact divide
    out_ref[:, pl.ds(0, P)] = e * r

    # ---------------- sigma: exp(raw) + 0.01 (mu gets NO exp) ---------------
    sg_raw = out_ref[:, pl.ds(P, P)]
    out_ref[:, pl.ds(P, P)] = jnp.exp(sg_raw) + 0.01


def _round_up(x, m):
    return ((x + m - 1) // m) * m


def mdn_forward(x, w1, b1, w2, b2, w3, b3, *, out_features, num_gaussians,
                block_b=256, use_bf16=True):
    B, F = x.shape
    H = w1.shape[1]
    O, G = out_features, num_gaussians
    OG = O * G
    assert w3.shape[1] == 3 * OG and b3.shape[1] == 3 * OG

    # Lane-aligned head layout: zero-pad each region (pi / sigma / mu) to
    # P = round_up(O*G, 128) columns.
    P = _round_up(OG, 128)
    W3 = 3 * P
    pad = P - OG
    w3p = jnp.concatenate(
        [jnp.pad(w3[:, r * OG:(r + 1) * OG], ((0, 0), (0, pad))) for r in range(3)],
        axis=1)
    b3p = jnp.concatenate(
        [jnp.pad(b3[:, r * OG:(r + 1) * OG], ((0, 0), (0, pad))) for r in range(3)],
        axis=1)

    # Block-diagonal 0/1 grouping matrix: bd[i, j] = (i // G == j // G).
    # Real groups never mix with padding groups because O*G is a multiple of G.
    gid = jnp.arange(P, dtype=jnp.int32) // G
    bd = (gid[:, None] == gid[None, :]).astype(jnp.float32)

    # Weights in bf16 once (MXU peak path); x stays f32 in HBM, cast in-kernel.
    if use_bf16:
        w1k, w2k, w3k = (w.astype(jnp.bfloat16) for w in (w1, w2, w3p))
    else:
        w1k, w2k, w3k = w1, w2, w3p

    # Batch tiling: 256-row tiles by default; for small batches still emit >=2
    # tiles (when B >= 16) so the "parallel" axis shards across v7x's 2 cores.
    if B <= block_b:
        TB = _round_up(pl.cdiv(B, 2), 8) if B >= 16 else B
    else:
        TB = block_b
    grid = (pl.cdiv(B, TB),)

    wbytes = 2 if use_bf16 else 4
    # Rough VMEM footprint: resident weights/bias/bd + double-buffered x/out
    # tiles + f32 intermediates.  TODO(synk): add a K-tiling grid axis with an
    # f32 accumulator if the weights ever exceed ~half of v7x's 64 MiB VMEM.
    vmem_est = ((wbytes * (F * H + H * H + H * W3) + 4 * (2 * H + W3) + 4 * P * P
                 + 2 * 4 * TB * (F + W3)) * 2 + 4 * TB * (2 * H + 2 * W3))
    vmem_limit = int(min(64 * 1024 * 1024, max(2 * vmem_est, 16 * 1024 * 1024)))

    cost = pl.CostEstimate(
        flops=int(2 * B * (F * H + H * H + H * W3 + P * P)),
        transcendentals=int(2 * B * P),
        bytes_accessed=int(4 * B * F + wbytes * (F * H + H * H + H * W3)
                           + 4 * (2 * H + W3) + 4 * P * P + 4 * B * W3),
    )

    kernel = functools.partial(mdn_kernel, P=P)

    fused = pl.pallas_call(
        kernel,
        grid=grid,
        in_specs=[
            pl.BlockSpec((TB, F), lambda i: (i, 0)),   # activations: pipelined
            pl.BlockSpec((F, H),  lambda i: (0, 0)),   # weights/bias/bd: resident
            pl.BlockSpec((1, H),  lambda i: (0, 0)),
            pl.BlockSpec((H, H),  lambda i: (0, 0)),
            pl.BlockSpec((1, H),  lambda i: (0, 0)),
            pl.BlockSpec((H, W3), lambda i: (0, 0)),
            pl.BlockSpec((1, W3), lambda i: (0, 0)),
            pl.BlockSpec((P, P),  lambda i: (0, 0)),
        ],
        out_specs=pl.BlockSpec((TB, W3), lambda i: (i, 0)),
        out_shape=jax.ShapeDtypeStruct((B, W3), jnp.float32),
        compiler_params=pltpu.CompilerParams(
            dimension_semantics=("parallel",),
            vmem_limit_bytes=vmem_limit),
        cost_estimate=cost,
    )(x, w1k, b1, w2k, b2, w3k, b3p, bd)

    pi = fused[:, :OG].reshape(B, O, G)
    sigma = fused[:, P:P + OG].reshape(B, O, G)
    mu = fused[:, 2 * P:2 * P + OG].reshape(B, O, G)
    return pi, sigma, mu


def init_params(key, in_features, hidden_dim, out_features, num_gaussians):
    """Deterministic PyTorch-style uniform(-1/sqrt(fan_in), 1/sqrt(fan_in)) init."""
    dims = [
        (in_features, hidden_dim),
        (hidden_dim, hidden_dim),
        (hidden_dim, out_features * num_gaussians * 3),
    ]
    params = []
    for fan_in, fan_out in dims:
        key, kw, kb = jax.random.split(key, 3)
        bound = 1.0 / (fan_in ** 0.5)
        w = jax.random.uniform(kw, (fan_in, fan_out), jnp.float32, -bound, bound)
        b = jax.random.uniform(kb, (1, fan_out), jnp.float32, -bound, bound)
        params += [w, b]
    return params


if __name__ == "__main__":
    batch = 2
    in_features = 32
    hidden_dim = 32
    out_features = 4
    num_gaussians = 8

    key = jax.random.PRNGKey(0)
    key, kx = jax.random.split(key)
    x = jax.random.normal(kx, (batch, in_features), jnp.float32)

    w1, b1, w2, b2, w3, b3 = init_params(
        key, in_features, hidden_dim, out_features, num_gaussians)

    pi, sigma, mu = mdn_forward(
        x, w1, b1, w2, b2, w3, b3,
        out_features=out_features, num_gaussians=num_gaussians)
    jax.block_until_ready((pi, sigma, mu))

    # Pure-JAX reference of the PyTorch forward, with the same bf16 operand
    # casts (f32 accumulation) that the kernel uses.
    xb = x.astype(jnp.bfloat16)
    w1b, w2b, w3b = (w.astype(jnp.bfloat16) for w in (w1, w2, w3))
    h1 = jnp.maximum(jnp.dot(xb, w1b, preferred_element_type=jnp.float32) + b1, 0.0)
    h2 = jnp.maximum(
        jnp.dot(h1.astype(jnp.bfloat16), w2b, preferred_element_type=jnp.float32) + b2, 0.0)
    out = jnp.dot(h2.astype(jnp.bfloat16), w3b, preferred_element_type=jnp.float32) + b3
    out = out.reshape(-1, 3, out_features, num_gaussians)
    pi_ref = jax.nn.softmax(out[:, 0], axis=-1)
    sigma_ref = jnp.exp(out[:, 1]) + 0.01
    mu_ref = out[:, 2]

    assert pi.shape == (batch, out_features, num_gaussians)
    assert sigma.shape == (batch, out_features, num_gaussians)
    assert mu.shape == (batch, out_features, num_gaussians)
    assert jnp.allclose(pi, pi_ref, atol=2e-3), float(jnp.max(jnp.abs(pi - pi_ref)))
    assert jnp.allclose(sigma, sigma_ref, atol=1e-3), float(jnp.max(jnp.abs(sigma - sigma_ref)))
    assert jnp.allclose(mu, mu_ref, atol=1e-3), float(jnp.max(jnp.abs(mu - mu_ref)))

    print("KERNEL_OK")
</pallas_src>

<mosaic_0001>
module attributes {stable_mosaic.version = 11 : i64} {
  func.func @mdn_kernel(%arg0: i32, %arg1: memref<2x32xf32, #tpu.memory_space<vmem>>, %arg2: memref<32x32xbf16, #tpu.memory_space<vmem>>, %arg3: memref<1x32xf32, #tpu.memory_space<vmem>>, %arg4: memref<32x32xbf16, #tpu.memory_space<vmem>>, %arg5: memref<1x32xf32, #tpu.memory_space<vmem>>, %arg6: memref<32x384xbf16, #tpu.memory_space<vmem>>, %arg7: memref<1x384xf32, #tpu.memory_space<vmem>>, %arg8: memref<128x128xf32, #tpu.memory_space<vmem>>, %arg9: memref<2x384xf32, #tpu.memory_space<vmem>>) attributes {dimension_semantics = [#tpu.dimension_semantics<parallel>], iteration_bounds = array<i64: 1>, scalar_prefetch = 0 : i64, scratch_operands = 0 : i64, tpu.core_type = #tpu.core_type<tc>, window_params = [{transform_indices = @transform_0, window_bounds = array<i64: 2, 32>}, {pipeline_mode = #tpu.pipeline_mode<synchronous>, transform_indices = @transform_1, window_bounds = array<i64: 32, 32>}, {pipeline_mode = #tpu.pipeline_mode<synchronous>, transform_indices = @transform_2, window_bounds = array<i64: 1, 32>}, {pipeline_mode = #tpu.pipeline_mode<synchronous>, transform_indices = @transform_3, window_bounds = array<i64: 32, 32>}, {pipeline_mode = #tpu.pipeline_mode<synchronous>, transform_indices = @transform_4, window_bounds = array<i64: 1, 32>}, {pipeline_mode = #tpu.pipeline_mode<synchronous>, transform_indices = @transform_5, window_bounds = array<i64: 32, 384>}, {pipeline_mode = #tpu.pipeline_mode<synchronous>, transform_indices = @transform_6, window_bounds = array<i64: 1, 384>}, {pipeline_mode = #tpu.pipeline_mode<synchronous>, transform_indices = @transform_7, window_bounds = array<i64: 128, 128>}, {transform_indices = @transform_8, window_bounds = array<i64: 2, 384>}]} {
    %c0 = arith.constant 0 : index
    %c0_0 = arith.constant 0 : index
    %0 = vector.load %arg1[%c0, %c0_0] : memref<2x32xf32, #tpu.memory_space<vmem>>, vector<2x32xf32>
    %1 = arith.truncf %0 : vector<2x32xf32> to vector<2x32xbf16>
    %c0_1 = arith.constant 0 : index
    %c0_2 = arith.constant 0 : index
    %2 = vector.load %arg2[%c0_1, %c0_2] : memref<32x32xbf16, #tpu.memory_space<vmem>>, vector<32x32xbf16>
    %cst = arith.constant dense<0.000000e+00> : vector<2x32xf32>
    %3 = tpu.matmul %1, %2, %cst {dimension_numbers = #tpu.dot_dimension_numbers<[1], [0], [0], [1], [0, 0, 1, 1], [], []>} : vector<2x32xbf16>, vector<32x32xbf16>, vector<2x32xf32> -> vector<2x32xf32>
    %c0_3 = arith.constant 0 : index
    %c0_4 = arith.constant 0 : index
    %4 = vector.load %arg3[%c0_3, %c0_4] : memref<1x32xf32, #tpu.memory_space<vmem>>, vector<1x32xf32>
    %5 = vector.broadcast %4 : vector<1x32xf32> to vector<2x32xf32>
    %6 = arith.addf %3, %5 : vector<2x32xf32>
    %cst_5 = arith.constant 0.000000e+00 : f32
    %7 = vector.broadcast %cst_5 : f32 to vector<2x32xf32>
    %8 = arith.maximumf %6, %7 : vector<2x32xf32>
    %9 = arith.truncf %8 : vector<2x32xf32> to vector<2x32xbf16>
    %c0_6 = arith.constant 0 : index
    %c0_7 = arith.constant 0 : index
    %10 = vector.load %arg4[%c0_6, %c0_7] : memref<32x32xbf16, #tpu.memory_space<vmem>>, vector<32x32xbf16>
    %cst_8 = arith.constant dense<0.000000e+00> : vector<2x32xf32>
    %11 = tpu.matmul %9, %10, %cst_8 {dimension_numbers = #tpu.dot_dimension_numbers<[1], [0], [0], [1], [0, 0, 1, 1], [], []>} : vector<2x32xbf16>, vector<32x32xbf16>, vector<2x32xf32> -> vector<2x32xf32>
    %c0_9 = arith.constant 0 : index
    %c0_10 = arith.constant 0 : index
    %12 = vector.load %arg5[%c0_9, %c0_10] : memref<1x32xf32, #tpu.memory_space<vmem>>, vector<1x32xf32>
    %13 = vector.broadcast %12 : vector<1x32xf32> to vector<2x32xf32>
    %14 = arith.addf %11, %13 : vector<2x32xf32>
    %cst_11 = arith.constant 0.000000e+00 : f32
    %15 = vector.broadcast %cst_11 : f32 to vector<2x32xf32>
    %16 = arith.maximumf %14, %15 : vector<2x32xf32>
    %17 = arith.truncf %16 : vector<2x32xf32> to vector<2x32xbf16>
    %c0_12 = arith.constant 0 : index
    %c0_13 = arith.constant 0 : index
    %18 = vector.load %arg6[%c0_12, %c0_13] : memref<32x384xbf16, #tpu.memory_space<vmem>>, vector<32x384xbf16>
    %cst_14 = arith.constant dense<0.000000e+00> : vector<2x384xf32>
    %19 = tpu.matmul %17, %18, %cst_14 {dimension_numbers = #tpu.dot_dimension_numbers<[1], [0], [0], [1], [0, 0, 1, 1], [], []>} : vector<2x32xbf16>, vector<32x384xbf16>, vector<2x384xf32> -> vector<2x384xf32>
    %c0_15 = arith.constant 0 : index
    %c0_16 = arith.constant 0 : index
    %20 = vector.load %arg7[%c0_15, %c0_16] : memref<1x384xf32, #tpu.memory_space<vmem>>, vector<1x384xf32>
    %21 = vector.broadcast %20 : vector<1x384xf32> to vector<2x384xf32>
    %22 = arith.addf %19, %21 : vector<2x384xf32>
    %c0_17 = arith.constant 0 : index
    %c0_18 = arith.constant 0 : index
    %23 = vector.load %arg9[%c0_17, %c0_18] : memref<2x384xf32, #tpu.memory_space<vmem>>, vector<2x384xf32>
    tpu.vector_store %arg9[%c0_17, %c0_18], %22 {strides = array<i32>} : memref<2x384xf32, #tpu.memory_space<vmem>>, vector<2x384xf32>,
    %c0_19 = arith.constant 0 : index
    %c0_20 = arith.constant 0 : index
    %24 = vector.load %arg9[%c0_19, %c0_20] : memref<2x384xf32, #tpu.memory_space<vmem>>, vector<2x128xf32>
    %cst_21 = arith.constant dense<0xFF800000> : vector<2xf32>
    %25 = vector.multi_reduction <maximumf>, %24, %cst_21 [1] : vector<2x128xf32> to vector<2xf32>
    %26 = vector.shape_cast %25 : vector<2xf32> to vector<2x1xf32>
    %27 = vector.broadcast %26 : vector<2x1xf32> to vector<2x128xf32>
    %28 = arith.subf %24, %27 : vector<2x128xf32>
    %29 = math.exp %28 : vector<2x128xf32>
    %c0_22 = arith.constant 0 : index
    %c0_23 = arith.constant 0 : index
    %30 = vector.load %arg8[%c0_22, %c0_23] : memref<128x128xf32, #tpu.memory_space<vmem>>, vector<128x128xf32>
    %cst_24 = arith.constant dense<0.000000e+00> : vector<2x128xf32>
    %31 = tpu.matmul %29, %30, %cst_24 {dimension_numbers = #tpu.dot_dimension_numbers<[1], [0], [0], [1], [0, 0, 1, 1], [], []>} : vector<2x128xf32>, vector<128x128xf32>, vector<2x128xf32> -> vector<2x128xf32>
    %cst_25 = arith.constant 1.000000e-30 : f32
    %32 = vector.broadcast %cst_25 : f32 to vector<2x128xf32>
    %33 = arith.maximumf %31, %32 : vector<2x128xf32>
    %34 = tpu.reciprocal %33 {approx = true} : vector<2x128xf32> -> vector<2x128xf32>
    %35 = arith.mulf %33, %34 : vector<2x128xf32>
    %cst_26 = arith.constant 2.000000e+00 : f32
    %36 = vector.broadcast %cst_26 : f32 to vector<2x128xf32>
    %37 = arith.subf %36, %35 : vector<2x128xf32>
    %38 = arith.mulf %34, %37 : vector<2x128xf32>
    %39 = arith.mulf %29, %38 : vector<2x128xf32>
    %c0_27 = arith.constant 0 : index
    %c0_28 = arith.constant 0 : index
    %40 = vector.load %arg9[%c0_27, %c0_28] : memref<2x384xf32, #tpu.memory_space<vmem>>, vector<2x128xf32>
    tpu.vector_store %arg9[%c0_27, %c0_28], %39 {strides = array<i32>} : memref<2x384xf32, #tpu.memory_space<vmem>>, vector<2x128xf32>,
    %c0_29 = arith.constant 0 : index
    %c128 = arith.constant 128 : index
    %41 = vector.load %arg9[%c0_29, %c128] : memref<2x384xf32, #tpu.memory_space<vmem>>, vector<2x128xf32>
    %42 = math.exp %41 : vector<2x128xf32>
    %cst_30 = arith.constant 0.00999999977 : f32
    %43 = vector.broadcast %cst_30 : f32 to vector<2x128xf32>
    %44 = arith.addf %42, %43 : vector<2x128xf32>
    %c0_31 = arith.constant 0 : index
    %c128_32 = arith.constant 128 : index
    %45 = vector.load %arg9[%c0_31, %c128_32] : memref<2x384xf32, #tpu.memory_space<vmem>>, vector<2x128xf32>
    tpu.vector_store %arg9[%c0_31, %c128_32], %44 {strides = array<i32>} : memref<2x384xf32, #tpu.memory_space<vmem>>, vector<2x128xf32>,
    return
  }
  func.func @transform_0(%arg0: i32) -> (i32, i32) {
    %c0_i32 = arith.constant 0 : i32
    %c0_i32_0 = arith.constant 0 : i32
    return %arg0, %c0_i32 : i32, i32
  }
  func.func @transform_1(%arg0: i32) -> (i32, i32) {
    %c0_i32 = arith.constant 0 : i32
    %c0_i32_0 = arith.constant 0 : i32
    %c0_i32_1 = arith.constant 0 : i32
    return %c0_i32, %c0_i32_0 : i32, i32
  }
  func.func @transform_2(%arg0: i32) -> (i32, i32) {
    %c0_i32 = arith.constant 0 : i32
    %c0_i32_0 = arith.constant 0 : i32
    %c0_i32_1 = arith.constant 0 : i32
    return %c0_i32, %c0_i32_0 : i32, i32
  }
  func.func @transform_3(%arg0: i32) -> (i32, i32) {
    %c0_i32 = arith.constant 0 : i32
    %c0_i32_0 = arith.constant 0 : i32
    %c0_i32_1 = arith.constant 0 : i32
    return %c0_i32, %c0_i32_0 : i32, i32
  }
  func.func @transform_4(%arg0: i32) -> (i32, i32) {
    %c0_i32 = arith.constant 0 : i32
    %c0_i32_0 = arith.constant 0 : i32
    %c0_i32_1 = arith.constant 0 : i32
    return %c0_i32, %c0_i32_0 : i32, i32
  }
  func.func @transform_5(%arg0: i32) -> (i32, i32) {
    %c0_i32 = arith.constant 0 : i32
    %c0_i32_0 = arith.constant 0 : i32
    %c0_i32_1 = arith.constant 0 : i32
    return %c0_i32, %c0_i32_0 : i32, i32
  }
  func.func @transform_6(%arg0: i32) -> (i32, i32) {
    %c0_i32 = arith.constant 0 : i32
    %c0_i32_0 = arith.constant 0 : i32
    %c0_i32_1 = arith.constant 0 : i32
    return %c0_i32, %c0_i32_0 : i32, i32
  }
  func.func @transform_7(%arg0: i32) -> (i32, i32) {
    %c0_i32 = arith.constant 0 : i32
    %c0_i32_0 = arith.constant 0 : i32
    %c0_i32_1 = arith.constant 0 : i32
    return %c0_i32, %c0_i32_0 : i32, i32
  }
  func.func @transform_8(%arg0: i32) -> (i32, i32) {
    %c0_i32 = arith.constant 0 : i32
    %c0_i32_0 = arith.constant 0 : i32
    return %arg0, %c0_i32 : i32, i32
  }
}

</mosaic_0001>

<llo_original>
// kernel: tpu_custom_call.1
$region0: #{tpu_custom_call.1}
  #allocation0 [shape = 'u32[]', space=smem, size = 0x4, offset = 0x4, fixed_abs, tag = 'smem constant byte address 0x4 - core index']
  #allocation1 [shape = 'u32[144,128]{1,0:T(1,128)}', space=vmem, size = 0x12000, scoped, tag = 'internal scratch']
  %s0 = inlined_call_operand.hbm [shape: f32[2,32], index: 0, kind: input, shape index: {}]
  %s1 = inlined_call_operand.hbm [shape: bf16[32,32], index: 1, kind: input, shape index: {}]
  %s2 = inlined_call_operand.vmem [shape: f32[1,32], index: 2, kind: input, shape index: {}]
  %s3 = inlined_call_operand.hbm [shape: bf16[32,32], index: 3, kind: input, shape index: {}]
  %s4 = inlined_call_operand.vmem [shape: f32[1,32], index: 4, kind: input, shape index: {}]
  %s5 = inlined_call_operand.hbm [shape: bf16[32,384], index: 5, kind: input, shape index: {}]
  %s6 = inlined_call_operand.vmem [shape: f32[1,384], index: 6, kind: input, shape index: {}]
  %s7 = inlined_call_operand.hbm [shape: f32[128,128], index: 7, kind: input, shape index: {}]
  %s8 = inlined_call_operand.hbm [shape: f32[2,384], index: 8, kind: output, shape index: {}]
  %s9 = sld [smem:[#allocation0]]
  $region62: #{tpu_custom_call.1} parent=0
    _
  %s11 = ssub.s32 1, %s9
  %s12 = scalar_select 0, %s11, %s9
  $region1: #{tpu_custom_call.1} parent=0
    #allocation2 [shape = 'u8[1024]{0}', space=vmem, size = 0x400, scoped, tag = 'input window, operand 0, single buffered']
    #allocation3 [shape = 's32[1]{0}', space=sflag, size = 0x4, scoped, tag = 'scoped memory for tpu_custom_call.1']
    #allocation4 [shape = 's32[1]{0}', space=sflag, size = 0x4, scoped, tag = 'scoped memory for tpu_custom_call.1']
    #allocation5 [shape = 'u8[8192]{0}', space=vmem, size = 0x2000, scoped, tag = 'input window, operand 1, single buffered']
    #allocation6 [shape = 's32[1]{0}', space=sflag, size = 0x4, scoped, tag = 'scoped memory for tpu_custom_call.1']
    #allocation7 [shape = 'u8[8192]{0}', space=vmem, size = 0x2000, scoped, tag = 'input window, operand 3, single buffered']
    #allocation8 [shape = 'u8[24576]{0}', space=vmem, size = 0x6000, scoped, tag = 'input window, operand 5, single buffered']
    #allocation9 [shape = 's32[1]{0}', space=sflag, size = 0x4, scoped, tag = 'scoped memory for tpu_custom_call.1']
    #allocation10 [shape = 'u8[65536]{0}', space=vmem, size = 0x10000, scoped, tag = 'input window, operand 7, single buffered']
    #allocation11 [shape = 'u8[3072]{0}', space=vmem, size = 0xc00, scoped, tag = 'output window, operand 0, single buffered']
    %13 = vsyncpa [#allocation3], 0
    %14 = vsyncpa [#allocation6], 0
    %15 = vsyncpa [#allocation9], 0
    %16 = vsyncpa [#allocation4], 0
    // Predicated region
    $region2: #{tpu_custom_call.1} parent=1 // pred_check
      _
    $region3: #{tpu_custom_call.1} parent=1 // pred_check_branch
      %18 = sbr.rel (0) target = $region5
    $region4: #{tpu_custom_call.1} parent=1 // pred_region
      %s20 = ssub.s32 32, 32
      %21 = vsyncadd [#allocation3], %s20
      %s23 = sshll.u32 [#allocation2], 4
      %s24 = int_to_ptr.vmem [resolvable:$true] %s23
      %26 = dma.hbm_to_vmem [thread:$0]  %s0, 32, %s24, [#allocation3]
    $region5: #{tpu_custom_call.1} parent=1 // pred_fallthru
      _
    // Predicated region
    $region6: #{tpu_custom_call.1} parent=1 // pred_check
      _
    $region7: #{tpu_custom_call.1} parent=1 // pred_check_branch
      %28 = sbr.rel (0) target = $region9
    $region8: #{tpu_custom_call.1} parent=1 // pred_region
      %s30 = ssub.s32 256, 256
      %31 = vsyncadd [#allocation6], %s30
      %s32 = sshll.u32 [#allocation5], 4
      %s33 = int_to_ptr.vmem [resolvable:$true] %s32
      %38 = dma.hbm_to_vmem [thread:$0]  %s1, 256, %s33, [#allocation6], 64, 64, 4
    $region9: #{tpu_custom_call.1} parent=1 // pred_fallthru
      _
    // Predicated region
    $region10: #{tpu_custom_call.1} parent=1 // pred_check
      _
    $region11: #{tpu_custom_call.1} parent=1 // pred_check_branch
      %40 = sbr.rel (0) target = $region13
    $region12: #{tpu_custom_call.1} parent=1 // pred_region
      _
    $region13: #{tpu_custom_call.1} parent=1 // pred_fallthru
      _
    // Predicated region
    $region14: #{tpu_custom_call.1} parent=1 // pred_check
      _
    $region15: #{tpu_custom_call.1} parent=1 // pred_check_branch
      %42 = sbr.rel (0) target = $region17
    $region16: #{tpu_custom_call.1} parent=1 // pred_region
      %s44 = ssub.s32 256, 256
      %45 = vsyncadd [#allocation6], %s44
      %s46 = sshll.u32 [#allocation7], 4
      %s47 = int_to_ptr.vmem [resolvable:$true] %s46
      %52 = dma.hbm_to_vmem [thread:$0]  %s3, 256, %s47, [#allocation6], 64, 64, 4
    $region17: #{tpu_custom_call.1} parent=1 // pred_fallthru
      _
    // Predicated region
    $region18: #{tpu_custom_call.1} parent=1 // pred_check
      _
    $region19: #{tpu_custom_call.1} parent=1 // pred_check_branch
      %54 = sbr.rel (0) target = $region21
    $region20: #{tpu_custom_call.1} parent=1 // pred_region
      _
    $region21: #{tpu_custom_call.1} parent=1 // pred_fallthru
      _
    // Predicated region
    $region22: #{tpu_custom_call.1} parent=1 // pred_check
      _
    $region23: #{tpu_custom_call.1} parent=1 // pred_check_branch
      %56 = sbr.rel (0) target = $region25
    $region24: #{tpu_custom_call.1} parent=1 // pred_region
      %s58 = ssub.s32 768, 768
      %59 = vsyncadd [#allocation9], %s58
      %s60 = sshll.u32 [#allocation8], 4
      %s61 = int_to_ptr.vmem [resolvable:$true] %s60
      %66 = dma.hbm_to_vmem [thread:$0]  %s5, 768, %s61, [#allocation9], 192, 192, 12
    $region25: #{tpu_custom_call.1} parent=1 // pred_fallthru
      _
    // Predicated region
    $region26: #{tpu_custom_call.1} parent=1 // pred_check
      _
    $region27: #{tpu_custom_call.1} parent=1 // pred_check_branch
      %68 = sbr.rel (0) target = $region29
    $region28: #{tpu_custom_call.1} parent=1 // pred_region
      _
    $region29: #{tpu_custom_call.1} parent=1 // pred_fallthru
      _
    // Predicated region
    $region30: #{tpu_custom_call.1} parent=1 // pred_check
      _
    $region31: #{tpu_custom_call.1} parent=1 // pred_check_branch
      %70 = sbr.rel (0) target = $region33
    $region32: #{tpu_custom_call.1} parent=1 // pred_region
      %s72 = ssub.s32 2048, 2048
      %73 = vsyncadd [#allocation9], %s72
      %s74 = sshll.u32 [#allocation10], 4
      %s75 = int_to_ptr.vmem [resolvable:$true] %s74
      %80 = dma.hbm_to_vmem [thread:$0]  %s7, 2048, %s75, [#allocation9], 128, 128, 8
    $region33: #{tpu_custom_call.1} parent=1 // pred_fallthru
      _
    // Predicated region
    $region34: #{tpu_custom_call.1} parent=1 // pred_check
      _
    $region35: #{tpu_custom_call.1} parent=1 // pred_check_branch
      %82 = sbr.rel (0) target = $region37
    $region36: #{tpu_custom_call.1} parent=1 // pred_region
      %83 = dma.done [#allocation3], 32
    $region37: #{tpu_custom_call.1} parent=1 // pred_fallthru
      _
    // Predicated region
    $region38: #{tpu_custom_call.1} parent=1 // pred_check
      _
    $region39: #{tpu_custom_call.1} parent=1 // pred_check_branch
      %85 = sbr.rel (0) target = $region41
    $region40: #{tpu_custom_call.1} parent=1 // pred_region
      %86 = dma.done [#allocation6], 256
    $region41: #{tpu_custom_call.1} parent=1 // pred_fallthru
      _
    // Predicated region
    $region42: #{tpu_custom_call.1} parent=1 // pred_check
      _
    $region43: #{tpu_custom_call.1} parent=1 // pred_check_branch
      %88 = sbr.rel (0) target = $region45
    $region44: #{tpu_custom_call.1} parent=1 // pred_region
      %89 = dma.done [#allocation6], 256
    $region45: #{tpu_custom_call.1} parent=1 // pred_fallthru
      _
    // Predicated region
    $region46: #{tpu_custom_call.1} parent=1 // pred_check
      _
    $region47: #{tpu_custom_call.1} parent=1 // pred_check_branch
      %91 = sbr.rel (0) target = $region49
    $region48: #{tpu_custom_call.1} parent=1 // pred_region
      %92 = dma.done [#allocation9], 768
    $region49: #{tpu_custom_call.1} parent=1 // pred_fallthru
      _
    // Predicated region
    $region50: #{tpu_custom_call.1} parent=1 // pred_check
      _
    $region51: #{tpu_custom_call.1} parent=1 // pred_check_branch
      %94 = sbr.rel (0) target = $region53
    $region52: #{tpu_custom_call.1} parent=1 // pred_region
      %95 = dma.done [#allocation9], 2048
    $region53: #{tpu_custom_call.1} parent=1 // pred_fallthru
      _
    %v97 = vld [vmem:[#allocation2] sm:$0x3]
    %v98 = vpack.c.bf16 %v97, %v97
    %v99 = vld [vmem:[#allocation5] sm:$0xf]
    %v100 = vld [vmem:[#allocation5 + $0x4] sm:$0xf]
    %v101 = vld [vmem:[#allocation5 + $0x8] sm:$0xf]
    %v102 = vld [vmem:[#allocation5 + $0xc] sm:$0xf]
    %v103 = vld [vmem:[%s2] sm:$0x1]
    %v105 = vlaneseq
    %v106 = vshrl.u32 %v105, 7
    %v107 = vsub.s32 0, %v106
    %v108 = vrot.slane %v103, %v107
    %v114 = vunpack.c.l.b16 %v99
    %v115 = vunpack.c.l.b16 %v100
    %v116 = vunpack.c.l.b16 %v101
    %v117 = vunpack.c.l.b16 %v102
    %v118 = vpack.c.b16 %v115, %v114
    %v119 = vpack.c.b16 %v117, %v116
    %vm122 = vcmask 261120
    %v124 = vsel %vm122, %v98, 0
    %126 = vmatprep.subr.bf16.mxu0 0
    %127 = vmatpush1.bf16.msra.mxu0 %v118
    %128 = vmatprep.subr.bf16.mxu0 0
    %129 = vmatpush1.bf16.msra.mxu0 %v119
    %130 = vmatprep.subr.bf16.mxu0 0
    %131 = vmatpush1.bf16.msra.mxu0 0
    %132 = vmatprep.subr.bf16.mxu0 0
    %133 = vmatpush1.bf16.msra.mxu0 0
    %134 = vmatprep.subr.bf16.mxu0 0
    %135 = vmatpush1.bf16.msra.mxu0 0
    %136 = vmatprep.subr.bf16.mxu0 0
    %137 = vmatpush1.bf16.msra.mxu0 0
    %138 = vmatprep.subr.bf16.mxu0 0
    %139 = vmatpush1.bf16.msra.mxu0 0
    %140 = vmatprep.subr.bf16.mxu0 0
    %141 = vmatpush1.bf16.msra.mxu0 0
    %142 = vmatprep.subr.bf16.mxu0 0
    %143 = vmatpush1.bf16.msra.mxu0 0
    %144 = vmatprep.subr.bf16.mxu0 0
    %145 = vmatpush1.bf16.msra.mxu0 0
    %146 = vmatprep.subr.bf16.mxu0 0
    %147 = vmatpush1.bf16.msra.mxu0 0
    %148 = vmatprep.subr.bf16.mxu0 0
    %149 = vmatpush1.bf16.msra.mxu0 0
    %150 = vmatprep.subr.bf16.mxu0 0
    %151 = vmatpush1.bf16.msra.mxu0 0
    %152 = vmatprep.subr.bf16.mxu0 0
    %153 = vmatpush1.bf16.msra.mxu0 0
    %154 = vmatprep.subr.bf16.mxu0 0
    %155 = vmatpush1.bf16.msra.mxu0 0
    %156 = vmatprep.subr.bf16.mxu0 0
    %157 = vmatpush1.bf16.msra.mxu0 0
    %158 = vmatprep.mubr.bf16.mxu0 0
    %159 = vmatmul.mubr.bf16.gmra.mrb[0].mxu0 %v124
    %v160 = vpop.f32.mrb[0].mxu0
    %v161 = vadd.f32 %v108, %v160
    %v162 = vpop.f32.mrb[0].mxu0
    %v163 = vpop.f32.mrb[0].mxu0
    %v164 = vpop.f32.mrb[0].mxu0
    %165 = vdwg.mxu0
    %v166 = vmax.f32 %v161, 0.0
    %v167 = vpack.c.bf16 %v166, %v166
    %v168 = vld [vmem:[#allocation7] sm:$0xf]
    %v169 = vld [vmem:[#allocation7 + $0x4] sm:$0xf]
    %v170 = vld [vmem:[#allocation7 + $0x8] sm:$0xf]
    %v171 = vld [vmem:[#allocation7 + $0xc] sm:$0xf]
    %v172 = vld [vmem:[%s4] sm:$0x1]
    %v174 = vlaneseq
    %v175 = vshrl.u32 %v174, 7
    %v176 = vsub.s32 0, %v175
    %v177 = vrot.slane %v172, %v176
    %v183 = vunpack.c.l.b16 %v168
    %v184 = vunpack.c.l.b16 %v169
    %v185 = vunpack.c.l.b16 %v170
    %v186 = vunpack.c.l.b16 %v171
    %v187 = vpack.c.b16 %v184, %v183
    %v188 = vpack.c.b16 %v186, %v185
    %v192 = vsel %vm122, %v167, 0
    %194 = vmatprep.subr.bf16.mxu0 0
    %195 = vmatpush1.bf16.msra.mxu0 %v187
    %196 = vmatprep.subr.bf16.mxu0 0
    %197 = vmatpush1.bf16.msra.mxu0 %v188
    %198 = vmatprep.subr.bf16.mxu0 0
    %199 = vmatpush1.bf16.msra.mxu0 0
    %200 = vmatprep.subr.bf16.mxu0 0
    %201 = vmatpush1.bf16.msra.mxu0 0
    %202 = vmatprep.subr.bf16.mxu0 0
    %203 = vmatpush1.bf16.msra.mxu0 0
    %204 = vmatprep.subr.bf16.mxu0 0
    %205 = vmatpush1.bf16.msra.mxu0 0
    %206 = vmatprep.subr.bf16.mxu0 0
    %207 = vmatpush1.bf16.msra.mxu0 0
    %208 = vmatprep.subr.bf16.mxu0 0
    %209 = vmatpush1.bf16.msra.mxu0 0
    %210 = vmatprep.subr.bf16.mxu0 0
    %211 = vmatpush1.bf16.msra.mxu0 0
    %212 = vmatprep.subr.bf16.mxu0 0
    %213 = vmatpush1.bf16.msra.mxu0 0
    %214 = vmatprep.subr.bf16.mxu0 0
    %215 = vmatpush1.bf16.msra.mxu0 0
    %216 = vmatprep.subr.bf16.mxu0 0
    %217 = vmatpush1.bf16.msra.mxu0 0
    %218 = vmatprep.subr.bf16.mxu0 0
    %219 = vmatpush1.bf16.msra.mxu0 0
    %220 = vmatprep.subr.bf16.mxu0 0
    %221 = vmatpush1.bf16.msra.mxu0 0
    %222 = vmatprep.subr.bf16.mxu0 0
    %223 = vmatpush1.bf16.msra.mxu0 0
    %224 = vmatprep.subr.bf16.mxu0 0
    %225 = vmatpush1.bf16.msra.mxu0 0
    %226 = vmatprep.mubr.bf16.mxu0 0
    %227 = vmatmul.mubr.bf16.gmra.mrb[0].mxu0 %v192
    %v228 = vpop.f32.mrb[0].mxu0
    %v229 = vadd.f32 %v177, %v228
    %v230 = vpop.f32.mrb[0].mxu0
    %v231 = vpop.f32.mrb[0].mxu0
    %v232 = vpop.f32.mrb[0].mxu0
    %233 = vdwg.mxu0
    %v234 = vmax.f32 %v229, 0.0
    %v235 = vpack.c.bf16 %v234, %v234
    %v236 = vld [vmem:[#allocation8] sm:$0xff]
    %v237 = vld [vmem:[#allocation8 + $0x8] sm:$0xf]
    %v238 = vld [vmem:[#allocation8 + $0xc] sm:$0xff]
    %v239 = vld [vmem:[#allocation8 + $0x14] sm:$0xf]
    %v240 = vld [vmem:[#allocation8 + $0x18] sm:$0xff]
    %v241 = vld [vmem:[#allocation8 + $0x20] sm:$0xf]
    %v242 = vld [vmem:[#allocation8 + $0x24] sm:$0xff]
    %v243 = vld [vmem:[#allocation8 + $0x2c] sm:$0xf]
    %v244 = vld [vmem:[%s6] sm:$0x7]
    %v246 = vlaneseq
    %v247 = vshrl.u32 %v246, 7
    %v248 = vsub.s32 0, %v247
    %v249 = vrot.slane %v244, %v248
    %v250 = vlaneseq
    %v251 = vshrl.u32 %v250, 7
    %v252 = vsub.s32 1, %v251
    %v253 = vrot.slane %v244, %v252
    %v254 = vlaneseq
    %v255 = vshrl.u32 %v254, 7
    %v256 = vsub.s32 2, %v255
    %v257 = vrot.slane %v244, %v256
    %v269 = vunpack.c.l.b16 %v236
    %v270 = vunpack.c.h.b16 %v236
    %v271 = vunpack.c.l.b16 %v237
    %v272 = vunpack.c.l.b16 %v238
    %v273 = vunpack.c.h.b16 %v238
    %v274 = vunpack.c.l.b16 %v239
    %v275 = vunpack.c.l.b16 %v240
    %v276 = vunpack.c.h.b16 %v240
    %v277 = vunpack.c.l.b16 %v241
    %v278 = vunpack.c.l.b16 %v242
    %v279 = vunpack.c.h.b16 %v242
    %v280 = vunpack.c.l.b16 %v243
    %v281 = vpack.c.b16 %v272, %v269
    %v282 = vpack.c.b16 %v273, %v270
    %v283 = vpack.c.b16 %v274, %v271
    %v284 = vpack.c.b16 %v278, %v275
    %v285 = vpack.c.b16 %v279, %v276
    %v286 = vpack.c.b16 %v280, %v277
    %v294 = vsel %vm122, %v235, 0
    %296 = vmatprep.subr.bf16.mxu0 %v282
    %297 = vmatpush1.bf16.msra.mxu0 %v281
    %298 = vmatprep.subr.bf16.mxu0 %v285
    %299 = vmatpush1.bf16.msra.mxu0 %v284
    %300 = vmatprep.subr.bf16.mxu0 0
    %301 = vmatpush1.bf16.msra.mxu0 0
    %302 = vmatprep.subr.bf16.mxu0 0
    %303 = vmatpush1.bf16.msra.mxu0 0
    %304 = vmatprep.subr.bf16.mxu0 0
    %305 = vmatpush1.bf16.msra.mxu0 0
    %306 = vmatprep.subr.bf16.mxu0 0
    %307 = vmatpush1.bf16.msra.mxu0 0
    %308 = vmatprep.subr.bf16.mxu0 0
    %309 = vmatpush1.bf16.msra.mxu0 0
    %310 = vmatprep.subr.bf16.mxu0 0
    %311 = vmatpush1.bf16.msra.mxu0 0
    %312 = vmatprep.subr.bf16.mxu0 0
    %313 = vmatpush1.bf16.msra.mxu0 0
    %314 = vmatprep.subr.bf16.mxu0 0
    %315 = vmatpush1.bf16.msra.mxu0 0
    %316 = vmatprep.subr.bf16.mxu0 0
    %317 = vmatpush1.bf16.msra.mxu0 0
    %318 = vmatprep.subr.bf16.mxu0 0
    %319 = vmatpush1.bf16.msra.mxu0 0
    %320 = vmatprep.subr.bf16.mxu0 0
    %321 = vmatpush1.bf16.msra.mxu0 0
    %322 = vmatprep.subr.bf16.mxu0 0
    %323 = vmatpush1.bf16.msra.mxu0 0
    %324 = vmatprep.subr.bf16.mxu0 0
    %325 = vmatpush1.bf16.msra.mxu0 0
    %326 = vmatprep.subr.bf16.mxu0 0
    %327 = vmatpush1.bf16.msra.mxu0 0
    %328 = vmatprep.mubr.bf16.mxu0 0
    %329 = vmatmul.mubr.bf16.gmra.mrb[0].mxu0 %v294
    %v330 = vpop.f32.mrb[0].mxu0
    %v331 = vadd.f32 %v249, %v330
    %v332 = vpop.f32.mrb[0].mxu0
    %v333 = vadd.f32 %v253, %v332
    %v334 = vpop.f32.mrb[0].mxu0
    %v335 = vpop.f32.mrb[0].mxu0
    %336 = vdwg.mxu0
    %337 = vmatprep.subr.bf16.mxu0 0
    %338 = vmatpush1.bf16.msra.mxu0 %v283
    %339 = vmatprep.subr.bf16.mxu0 0
    %340 = vmatpush1.bf16.msra.mxu0 %v286
    %341 = vmatprep.subr.bf16.mxu0 0
    %342 = vmatpush1.bf16.msra.mxu0 0
    %343 = vmatprep.subr.bf16.mxu0 0
    %344 = vmatpush1.bf16.msra.mxu0 0
    %345 = vmatprep.subr.bf16.mxu0 0
    %346 = vmatpush1.bf16.msra.mxu0 0
    %347 = vmatprep.subr.bf16.mxu0 0
    %348 = vmatpush1.bf16.msra.mxu0 0
    %349 = vmatprep.subr.bf16.mxu0 0
    %350 = vmatpush1.bf16.msra.mxu0 0
    %351 = vmatprep.subr.bf16.mxu0 0
    %352 = vmatpush1.bf16.msra.mxu0 0
    %353 = vmatprep.subr.bf16.mxu0 0
    %354 = vmatpush1.bf16.msra.mxu0 0
    %355 = vmatprep.subr.bf16.mxu0 0
    %356 = vmatpush1.bf16.msra.mxu0 0
    %357 = vmatprep.subr.bf16.mxu0 0
    %358 = vmatpush1.bf16.msra.mxu0 0
    %359 = vmatprep.subr.bf16.mxu0 0
    %360 = vmatpush1.bf16.msra.mxu0 0
    %361 = vmatprep.subr.bf16.mxu0 0
    %362 = vmatpush1.bf16.msra.mxu0 0
    %363 = vmatprep.subr.bf16.mxu0 0
    %364 = vmatpush1.bf16.msra.mxu0 0
    %365 = vmatprep.subr.bf16.mxu0 0
    %366 = vmatpush1.bf16.msra.mxu0 0
    %367 = vmatprep.subr.bf16.mxu0 0
    %368 = vmatpush1.bf16.msra.mxu0 0
    %369 = vmatprep.mubr.bf16.mxu0 0
    %370 = vmatmul.mubr.bf16.gmra.mrb[0].mxu0 %v294
    %v371 = vpop.f32.mrb[0].mxu0
    %v372 = vadd.f32 %v257, %v371
    %v373 = vpop.f32.mrb[0].mxu0
    %v374 = vpop.f32.mrb[0].mxu0
    %v375 = vpop.f32.mrb[0].mxu0
    %376 = vdwg.mxu0
    %v380 = vcombine.low %v331, %v333
    %v382 = vunpack.c.l.s4 1983009808
    %v383 = vunpack.c.0.s8 %v382
    %v384 = vlaneseq
    %v385 = vshrl.u32 %v384, 7
    %v386 = vsub.s32 %v383, %v385
    %v387 = vrot.slane %v380, %v386
    %v389 = vunpack.c.l.s4 1983009808
    %v390 = vunpack.c.0.s8 %v389
    %v391 = vlaneseq
    %v392 = vshrl.u32 %v391, 7
    %v393 = vsub.s32 %v390, %v392
    %v394 = vrot.slane %v372, %v393
    %v395 = vcombine.low %v387, %v394
    %397 = vst [vmem:[#allocation11] sm:$0x3f] %v395
    %v398 = vld [vmem:[#allocation11] sm:$0x3]
    %vm399 = vcmask 1041408
    %v400 = vsel %vm399, %v398, -inf
    %401 = vmax.xlane.f32.xlu0 %v400
    %v402 = vpop.xlane.xlu0 %401
    %v403 = vsub.f32 %v398, %v402
    %v404 = vmul.f32 %v403, 1.442695
    %v405 = vpow.pop %v404
    %v406 = vld [vmem:[#allocation10] sm:$0xff]
    %v407 = vld [vmem:[#allocation10 + $0x8] sm:$0xff]
    %v408 = vld [vmem:[#allocation10 + $0x10] sm:$0xff]
    %v409 = vld [vmem:[#allocation10 + $0x18] sm:$0xff]
    %v410 = vld [vmem:[#allocation10 + $0x20] sm:$0xff]
    %v411 = vld [vmem:[#allocation10 + $0x28] sm:$0xff]
    %v412 = vld [vmem:[#allocation10 + $0x30] sm:$0xff]
    %v413 = vld [vmem:[#allocation10 + $0x38] sm:$0xff]
    %v414 = vld [vmem:[#allocation10 + $0x40] sm:$0xff]
    %v415 = vld [vmem:[#allocation10 + $0x48] sm:$0xff]
    %v416 = vld [vmem:[#allocation10 + $0x50] sm:$0xff]
    %v417 = vld [vmem:[#allocation10 + $0x58] sm:$0xff]
    %v418 = vld [vmem:[#allocation10 + $0x60] sm:$0xff]
    %v419 = vld [vmem:[#allocation10 + $0x68] sm:$0xff]
    %v420 = vld [vmem:[#allocation10 + $0x70] sm:$0xff]
    %v421 = vld [vmem:[#allocation10 + $0x78] sm:$0xff]
    %422 = vmatprep.subr.mxu0 0.0
    %423 = vmatpush1.msra.mxu0 %v406
    %424 = vmatprep.subr.mxu0 0.0
    %425 = vmatpush1.msra.mxu0 %v407
    %426 = vmatprep.subr.mxu0 0.0
    %427 = vmatpush1.msra.mxu0 %v408
    %428 = vmatprep.subr.mxu0 0.0
    %429 = vmatpush1.msra.mxu0 %v409
    %430 = vmatprep.subr.mxu0 0.0
    %431 = vmatpush1.msra.mxu0 %v410
    %432 = vmatprep.subr.mxu0 0.0
    %433 = vmatpush1.msra.mxu0 %v411
    %434 = vmatprep.subr.mxu0 0.0
    %435 = vmatpush1.msra.mxu0 %v412
    %436 = vmatprep.subr.mxu0 0.0
    %437 = vmatpush1.msra.mxu0 %v413
    %438 = vmatprep.subr.mxu0 0.0
    %439 = vmatpush1.msra.mxu0 %v414
    %440 = vmatprep.subr.mxu0 0.0
    %441 = vmatpush1.msra.mxu0 %v415
    %442 = vmatprep.subr.mxu0 0.0
    %443 = vmatpush1.msra.mxu0 %v416
    %444 = vmatprep.subr.mxu0 0.0
    %445 = vmatpush1.msra.mxu0 %v417
    %446 = vmatprep.subr.mxu0 0.0
    %447 = vmatpush1.msra.mxu0 %v418
    %448 = vmatprep.subr.mxu0 0.0
    %449 = vmatpush1.msra.mxu0 %v419
    %450 = vmatprep.subr.mxu0 0.0
    %451 = vmatpush1.msra.mxu0 %v420
    %452 = vmatprep.subr.mxu0 0.0
    %453 = vmatpush1.msra.mxu0 %v421
    %454 = vmatprep.subr.mxu0 0.0
    %455 = vmatpush1.msra.mxu0 0.0
    %456 = vmatprep.subr.mxu0 0.0
    %457 = vmatpush1.msra.mxu0 0.0
    %458 = vmatprep.subr.mxu0 0.0
    %459 = vmatpush1.msra.mxu0 0.0
    %460 = vmatprep.subr.mxu0 0.0
    %461 = vmatpush1.msra.mxu0 0.0
    %462 = vmatprep.subr.mxu0 0.0
    %463 = vmatpush1.msra.mxu0 0.0
    %464 = vmatprep.subr.mxu0 0.0
    %465 = vmatpush1.msra.mxu0 0.0
    %466 = vmatprep.subr.mxu0 0.0
    %467 = vmatpush1.msra.mxu0 0.0
    %468 = vmatprep.subr.mxu0 0.0
    %469 = vmatpush1.msra.mxu0 0.0
    %470 = vmatprep.subr.mxu0 0.0
    %471 = vmatpush1.msra.mxu0 0.0
    %472 = vmatprep.subr.mxu0 0.0
    %473 = vmatpush1.msra.mxu0 0.0
    %474 = vmatprep.subr.mxu0 0.0
    %475 = vmatpush1.msra.mxu0 0.0
    %476 = vmatprep.subr.mxu0 0.0
    %477 = vmatpush1.msra.mxu0 0.0
    %478 = vmatprep.subr.mxu0 0.0
    %479 = vmatpush1.msra.mxu0 0.0
    %480 = vmatprep.subr.mxu0 0.0
    %481 = vmatpush1.msra.mxu0 0.0
    %482 = vmatprep.subr.mxu0 0.0
    %483 = vmatpush1.msra.mxu0 0.0
    %484 = vmatprep.subr.mxu0 0.0
    %485 = vmatpush1.msra.mxu0 0.0
    %486 = vmatprep.mubr.f32.mxu0 0.0
    %487 = vmatmul.mubr.f32.gmra.mrb[0].mxu0 %v405
    %v488 = vpop.f32.mrb[0].mxu0
    %v489 = vadd.f32 0.0, %v488
    %v490 = vpop.f32.mrb[0].mxu0
    %491 = vdwg.mxu0
    %v492 = vmax.f32 %v489, 1e-30
    %v493 = vrcp.pop %v492
    %v494 = vmul.f32 %v492, %v493
    %v495 = vsub.f32 2.0, %v494
    %v496 = vmul.f32 %v493, %v495
    %v497 = vmul.f32 %v405, %v496
    %498 = vst [vmem:[#allocation11] sm:$0x3] %v497
    %v499 = vld [vmem:[#allocation11 + $0x2] sm:$0x3]
    %v500 = vmul.f32 %v499, 1.442695
    %v501 = vpow.pop %v500
    %v502 = vadd.f32 %v501, 0.01
    %503 = vst [vmem:[#allocation11 + $0x2] sm:$0x3] %v502
    // Predicated region
    $region54: #{tpu_custom_call.1} parent=1 // pred_check
      _
    $region55: #{tpu_custom_call.1} parent=1 // pred_check_branch
      %505 = sbr.rel (0) target = $region57
    $region56: #{tpu_custom_call.1} parent=1 // pred_region
      %s507 = ssub.s32 96, 96
      %508 = vsyncadd [#allocation4], %s507
      %s510 = sshll.u32 [#allocation11], 4
      %s511 = int_to_ptr.vmem [resolvable:$true] %s510
      %513 = dma.vmem_to_hbm [thread:$0]  %s511, 96, %s8, [#allocation4]
    $region57: #{tpu_custom_call.1} parent=1 // pred_fallthru
      _
    // Predicated region
    $region58: #{tpu_custom_call.1} parent=1 // pred_check
      _
    $region59: #{tpu_custom_call.1} parent=1 // pred_check_branch
      %515 = sbr.rel (0) target = $region61
    $region60: #{tpu_custom_call.1} parent=1 // pred_region
      %516 = dma.done [#allocation4], 96
    $region61: #{tpu_custom_call.1} parent=1 // pred_fallthru
      _
    %517 = vsyncpa [#allocation3], 1
    %518 = vsyncpa [#allocation6], 1
    %519 = vsyncpa [#allocation9], 1
    %520 = vsyncpa [#allocation4], 1

</llo_original>
